<compile_context>
chip_gen: v6e
topology: v6e:2x2x1
jax: 0.10.0
libtpu: 0.0.40
codegen_flags: <defaults>
</compile_context>

<pallas_src>
import functools

import jax
import jax.numpy as jnp
from jax.experimental import pallas as pl
from jax.experimental.pallas import tpu as pltpu


# ----------------------------------------------------------------------------- kernel


def cost_agg_kernel(warped_ref, ref_ref, out_ref, *, C, D, d_chunk):
    """Group-wise similarity for one source view / one pixel tile, summed over views.

    warped_ref: (1, 1, C*D, TP) bf16   C and D folded (no bf16 sublane padding)
    ref_ref:    (1, C, TP)      bf16   reference features, same pixel tile
    out_ref:    (1, 2, D, TP)   f32    resident across the innermost view axis
    """
    v = pl.program_id(2)
    first = v == 0

    # Fold the 2/C "mean over channel groups" factor into the (C, TP) ref cast:
    # C*TP multiplies per view instead of 2*D*TP scales of the per-view sums.
    scale = 2.0 / C
    ref_f32 = ref_ref[0].astype(jnp.float32) * scale             # (C, TP)

    # PyTorch:  (warped.view(b, c//2, 2, D, h, w) * ref.view(b, c//2, 2, 1, h, w)).mean(1)
    # i.e. output group g (g in {0,1}) = mean_i  warped[2i+g] * ref[2i+g].
    # Depth-chunked reduction keeps the accumulators (d_chunk, TP)-sized so they
    # stay in vregs instead of materializing (D, TP) f32 temps in VMEM per channel.
    for g in range(2):                                 # even / odd channel group
        for d0 in range(0, D, d_chunk):
            c0 = g
            acc = (warped_ref[0, 0, pl.ds(c0 * D + d0, d_chunk), :].astype(jnp.float32)
                   * ref_f32[c0:c0 + 1, :])
            for i in range(1, C // 2):
                c = 2 * i + g
                # TODO(synk): a stride-0 sublane-broadcast load of the ref row
                # (ref_ref[0, pl.ds(c, d_chunk, stride=0), :]) would move this
                # broadcast onto the load slot; kept as a (1, TP) VPU broadcast
                # for lowering safety.
                w = warped_ref[0, 0, pl.ds(c * D + d0, d_chunk), :].astype(jnp.float32)
                acc = acc + w * ref_f32[c:c + 1, :]

            @pl.when(first)
            def _():
                out_ref[0, g, pl.ds(d0, d_chunk), :] = acc

            @pl.when(v != 0)
            def _():
                out_ref[0, g, pl.ds(d0, d_chunk), :] = (
                    out_ref[0, g, pl.ds(d0, d_chunk), :] + acc)


# ----------------------------------------------------------------------------- pallas wrapper


def _pick_p_tile(Pp, C, D, cap=2048, budget_bytes=20 * 1024 * 1024):
    """Largest 128-multiple pixel tile dividing Pp whose double-buffered working
    set fits a conservative VMEM budget (valid on 64 MiB v7x as well)."""
    def block_bytes(tp):
        warped = C * D * tp * 2            # bf16 warped block
        ref = C * tp * 2                   # bf16 ref block
        out = 2 * D * tp * 4               # f32 output block
        return 2 * (warped + ref) + 2 * out   # double buffering
    for tp in (2048, 1024, 512, 256, 128):
        if tp <= cap and Pp % tp == 0 and block_bytes(tp) <= budget_bytes:
            return tp
    return 128


def _pick_d_chunk(D):
    return 8 if D % 8 == 0 else D


def cost_agg_pallas(warped_all, ref_flat, C, D, *, p_tile_cap=2048):
    """warped_all: (V, B, C*D, P) bf16 ; ref_flat: (B, C, P) bf16 -> (B, 2, D, P) f32."""
    V, B, CD, P = warped_all.shape
    assert CD == C * D
    assert C % 2 == 0, "CostAgg requires an even channel count"

    # Pad the pixel axis to a 128-lane multiple: lane-dense unmasked stores and
    # no whole-P fallback block (only costs an HBM copy when P is misaligned).
    Pp = ((P + 127) // 128) * 128
    if Pp != P:
        warped_all = jnp.pad(warped_all, ((0, 0), (0, 0), (0, 0), (0, Pp - P)))
        ref_flat = jnp.pad(ref_flat, ((0, 0), (0, 0), (0, Pp - P)))

    tp = _pick_p_tile(Pp, C, D, cap=p_tile_cap)
    d_chunk = _pick_d_chunk(D)
    # Pixel tiles lead so megacore sharding works even when B == 1;
    # V stays last (output block accumulates across it in VMEM).
    grid = (Pp // tp, B, V)

    out = pl.pallas_call(
        functools.partial(cost_agg_kernel, C=C, D=D, d_chunk=d_chunk),
        out_shape=jax.ShapeDtypeStruct((B, 2, D, Pp), jnp.float32),
        grid=grid,
        in_specs=[
            pl.BlockSpec((1, 1, CD, tp), lambda p, b, v: (v, b, 0, p)),
            pl.BlockSpec((1, C, tp), lambda p, b, v: (b, 0, p)),
        ],
        out_specs=pl.BlockSpec((1, 2, D, tp), lambda p, b, v: (b, 0, 0, p)),
        compiler_params=pltpu.CompilerParams(
            dimension_semantics=("parallel", "parallel", "arbitrary"),
            vmem_limit_bytes=48 * 1024 * 1024),
    )(warped_all, ref_flat)
    return out[:, :, :, :P] if Pp != P else out


# ----------------------------------------------------------------------------- plain-JAX glue


def _bilinear_sample(fea, x, y):
    # fea: (C, H, W); x/y: (N,) pixel coords; zero padding outside the image.
    _, H, W = fea.shape
    x0 = jnp.floor(x)
    y0 = jnp.floor(y)
    x1 = x0 + 1.0
    y1 = y0 + 1.0

    def gather(xi, yi):
        valid = (xi >= 0) & (xi <= W - 1) & (yi >= 0) & (yi <= H - 1)
        xc = jnp.clip(xi, 0, W - 1).astype(jnp.int32)
        yc = jnp.clip(yi, 0, H - 1).astype(jnp.int32)
        return fea[:, yc, xc] * valid.astype(fea.dtype)[None, :]

    w00 = (x1 - x) * (y1 - y)
    w01 = (x - x0) * (y1 - y)
    w10 = (x1 - x) * (y - y0)
    w11 = (x - x0) * (y - y0)
    return (gather(x0, y0) * w00 + gather(x1, y0) * w01 +
            gather(x0, y1) * w10 + gather(x1, y1) * w11)


def homo_warping(src_fea, src_proj, ref_proj, depth_values):
    # TODO(synk): homo_warping source not provided; standard MVSNet homography warp
    # (bilinear, zero padding) implemented in plain JAX because the data-dependent
    # gather has no clean Pallas equivalent. Returns bf16 so the cast fuses into
    # the gather output write (no extra f32->bf16 HBM copy).
    B, C, H, W = src_fea.shape
    D = depth_values.shape[1]
    proj = jnp.einsum('bij,bjk->bik', src_proj, jnp.linalg.inv(ref_proj))
    rot, trans = proj[:, :3, :3], proj[:, :3, 3]
    yy, xx = jnp.meshgrid(jnp.arange(H, dtype=jnp.float32),
                          jnp.arange(W, dtype=jnp.float32), indexing='ij')
    xyz = jnp.stack([xx.ravel(), yy.ravel(), jnp.ones(H * W, jnp.float32)], axis=0)  # (3, HW)
    rot_xyz = jnp.einsum('bij,jk->bik', rot, xyz)                                    # (B, 3, HW)
    rot_depth_xyz = rot_xyz[:, :, None, :] * depth_values.reshape(B, 1, D, H * W)
    proj_xyz = rot_depth_xyz + trans[:, :, None, None]                               # (B, 3, D, HW)
    z = proj_xyz[:, 2]
    eps = 1e-6
    # Sign-preserving clamp: points just behind the camera keep a negative depth.
    z = jnp.where(jnp.abs(z) < eps, jnp.where(z < 0, -eps, eps), z)
    px = (proj_xyz[:, 0] / z).reshape(B, D * H * W)
    py = (proj_xyz[:, 1] / z).reshape(B, D * H * W)
    warped = jax.vmap(_bilinear_sample)(src_fea, px, py)                             # (B, C, D*HW)
    return warped.reshape(B, C, D, H * W).astype(jnp.bfloat16)


def combine_proj(proj2):
    # proj2: (..., 2, 4, 4) [extrinsic, intrinsic] -> combined 4x4
    extr = proj2[..., 0, :, :]
    intr = proj2[..., 1, :, :]
    top = jnp.einsum('...ij,...jk->...ik', intr[..., :3, :3], extr[..., :3, :4])
    return extr.at[..., :3, :4].set(top)


def build_warped_volumes(features, proj_matrices, depth_values):
    """Returns (warped_all (V, B, C*D, P) bf16, ref_flat (B, C, P) bf16).

    All source views are warped by one vmapped call emitting bf16 directly, so the
    depth-expanded volume is written to HBM exactly once (no per-view stack/astype
    copies before the Pallas kernel reads it).
    TODO(synk): for very large D*P, chunk the warp+cost-agg pipeline over D to cap
    peak HBM instead of materializing the full (V, B, C*D, P) volume.
    Note: the bf16 boundary slightly changes numerics vs the f32 PyTorch CostAgg
    (accumulation stays f32 inside the kernel)."""
    assert len(features) >= 2, "CostAgg needs at least one source view"
    ref_fea = features[0]
    B, C, h, w = ref_fea.shape
    D = depth_values.shape[1]
    P = h * w
    V = len(features) - 1
    ref_proj_new = combine_proj(proj_matrices[:, 0])                  # (B, 4, 4)
    src_projs_new = combine_proj(proj_matrices[:, 1:])                # (B, V, 4, 4)
    src_stack = jnp.stack(features[1:], axis=0)                       # (V, B, C, h, w)
    warp = jax.vmap(homo_warping, in_axes=(0, 1, None, None))
    warped_all = warp(src_stack, src_projs_new, ref_proj_new, depth_values)   # (V,B,C,D,P)
    warped_all = warped_all.reshape(V, B, C * D, P)
    ref_flat = ref_fea.reshape(B, C, P).astype(jnp.bfloat16)
    return warped_all, ref_flat


def cost_agg_reference(warped_all, ref_flat, C, D):
    # Pure-JAX reference of CostAgg.forward's inner loop on the same bf16 inputs.
    V, B, CD, P = warped_all.shape
    wv = warped_all.astype(jnp.float32).reshape(V, B, C, D, P)
    rf = ref_flat.astype(jnp.float32)
    prod = wv * rf[None, :, :, None, :]                          # (V, B, C, D, P)
    sim = prod.reshape(V, B, C // 2, 2, D, P).mean(axis=2)       # (V, B, 2, D, P)
    return sim.sum(axis=0)                                       # (B, 2, D, P)


# ----------------------------------------------------------------------------- module


class CostAggPallas:
    """JAX/Pallas port of CostAgg (mode='variance' forward path)."""

    def __init__(self, mode='variance', in_channels=None):
        assert mode in ('variance', 'adaptive'), "Don't support {}!".format(mode)
        self.mode = mode
        if mode == 'adaptive':
            # TODO(synk): AggWeightNetVolume is not in the provided source; the given
            # forward() never uses it, so only 'variance' construction is supported.
            raise NotImplementedError("adaptive mode requires AggWeightNetVolume (not provided)")

    def __call__(self, features, proj_matrices, depth_values, stage_idx=0):
        """
        features: [ref_fea, src_fea1, ...] each (B, C, h, w)
        proj_matrices: (B, nview, 2, 4, 4)  [extrinsic, intrinsic] per view
        depth_values: (B, ndepth, h, w)
        returns: similarity_sum (B, 2, ndepth, h, w)
        """
        ref_fea = features[0]
        B, C, h, w = ref_fea.shape
        D = depth_values.shape[1]
        warped_all, ref_flat = build_warped_volumes(features, proj_matrices, depth_values)
        sim = cost_agg_pallas(warped_all, ref_flat, C, D)
        return sim.reshape(B, 2, D, h, w)


# ----------------------------------------------------------------------------- demo


def make_projs(B, nview, h, w):
    eye = jnp.eye(4, dtype=jnp.float32)
    intr = jnp.array([[w / 2.0, 0.0, w / 2.0, 0.0],
                      [0.0, h / 2.0, h / 2.0, 0.0],
                      [0.0, 0.0, 1.0, 0.0],
                      [0.0, 0.0, 0.0, 1.0]], jnp.float32)
    views = []
    for v in range(nview):
        extr = eye.at[0, 3].set(0.1 * v)                 # small x translation per view
        views.append(jnp.stack([extr, intr], axis=0))    # (2, 4, 4): [extrinsic, intrinsic]
    proj = jnp.stack(views, axis=0)                      # (nview, 2, 4, 4)
    return jnp.broadcast_to(proj[None], (B, nview, 2, 4, 4))


if __name__ == "__main__":
    key = jax.random.PRNGKey(0)
    B, NVIEW, C, H, W, D = 2, 3, 8, 16, 16, 8

    feat_keys = jax.random.split(key, NVIEW)
    features = [jax.random.normal(k, (B, C, H, W), jnp.float32) for k in feat_keys]
    proj_matrices = make_projs(B, NVIEW, H, W)
    depth_base = jnp.linspace(2.0, 9.0, D, dtype=jnp.float32)
    depth_values = jnp.broadcast_to(depth_base[None, :, None, None], (B, D, H, W))

    # End-to-end forward (matches the PyTorch module's output contract).
    model = CostAggPallas(mode='variance')
    cost = model(features, proj_matrices, depth_values, stage_idx=0)
    cost = jax.block_until_ready(cost)
    assert cost.shape == (B, 2, D, H, W)
    assert bool(jnp.all(jnp.isfinite(cost)))

    # Correctness check: kernel vs pure-JAX reference on the SAME bf16 inputs.
    warped_all, ref_flat = build_warped_volumes(features, proj_matrices, depth_values)
    kern_out = jax.block_until_ready(cost_agg_pallas(warped_all, ref_flat, C, D))
    ref_out = jax.block_until_ready(cost_agg_reference(warped_all, ref_flat, C, D))
    assert kern_out.shape == (B, 2, D, H * W)
    assert bool(jnp.allclose(kern_out, ref_out, atol=1e-3, rtol=1e-3)), "mismatch vs reference"

    print("KERNEL_OK")
</pallas_src>

<mosaic_0001>
module attributes {stable_mosaic.version = 11 : i64} {
  func.func @cost_agg_kernel(%arg0: i32, %arg1: i32, %arg2: i32, %arg3: memref<1x1x64x256xbf16, #tpu.memory_space<vmem>>, %arg4: memref<1x8x256xbf16, #tpu.memory_space<vmem>>, %arg5: memref<1x2x8x256xf32, #tpu.memory_space<vmem>>) attributes {dimension_semantics = [#tpu.dimension_semantics<parallel>, #tpu.dimension_semantics<parallel>, #tpu.dimension_semantics<arbitrary>], iteration_bounds = array<i64: 1, 2, 2>, scalar_prefetch = 0 : i64, scratch_operands = 0 : i64, tpu.core_type = #tpu.core_type<tc>, window_params = [{transform_indices = @transform_0, window_bounds = array<i64: 1, 1, 64, 256>}, {transform_indices = @transform_1, window_bounds = array<i64: 1, 8, 256>}, {transform_indices = @transform_2, window_bounds = array<i64: 1, 2, 8, 256>}]} {
    %c0_i32 = arith.constant 0 : i32
    %0 = arith.cmpi eq, %arg2, %c0_i32 : i32
    %c0 = arith.constant 0 : index
    %c0_0 = arith.constant 0 : index
    %c0_1 = arith.constant 0 : index
    %1 = vector.load %arg4[%c0, %c0_0, %c0_1] : memref<1x8x256xbf16, #tpu.memory_space<vmem>>, vector<1x8x256xbf16>
    %2 = vector.shape_cast %1 : vector<1x8x256xbf16> to vector<8x256xbf16>
    %3 = arith.extf %2 : vector<8x256xbf16> to vector<8x256xf32>
    %cst = arith.constant 2.500000e-01 : f32
    %4 = vector.broadcast %cst : f32 to vector<8x256xf32>
    %5 = arith.mulf %3, %4 : vector<8x256xf32>
    %c0_2 = arith.constant 0 : index
    %c0_3 = arith.constant 0 : index
    %c0_4 = arith.constant 0 : index
    %c0_5 = arith.constant 0 : index
    %6 = vector.load %arg3[%c0_2, %c0_3, %c0_4, %c0_5] : memref<1x1x64x256xbf16, #tpu.memory_space<vmem>>, vector<1x1x8x256xbf16>
    %7 = vector.shape_cast %6 : vector<1x1x8x256xbf16> to vector<8x256xbf16>
    %8 = arith.extf %7 : vector<8x256xbf16> to vector<8x256xf32>
    %9 = vector.extract_strided_slice %5 {offsets = [0, 0], sizes = [1, 256], strides = [1, 1]} : vector<8x256xf32> to vector<1x256xf32>
    %10 = vector.broadcast %9 : vector<1x256xf32> to vector<8x256xf32>
    %11 = arith.mulf %8, %10 : vector<8x256xf32>
    %c0_6 = arith.constant 0 : index
    %c0_7 = arith.constant 0 : index
    %c16 = arith.constant 16 : index
    %c0_8 = arith.constant 0 : index
    %12 = vector.load %arg3[%c0_6, %c0_7, %c16, %c0_8] : memref<1x1x64x256xbf16, #tpu.memory_space<vmem>>, vector<1x1x8x256xbf16>
    %13 = vector.shape_cast %12 : vector<1x1x8x256xbf16> to vector<8x256xbf16>
    %14 = arith.extf %13 : vector<8x256xbf16> to vector<8x256xf32>
    %15 = vector.extract_strided_slice %5 {offsets = [2, 0], sizes = [1, 256], strides = [1, 1]} : vector<8x256xf32> to vector<1x256xf32>
    %16 = vector.broadcast %15 : vector<1x256xf32> to vector<8x256xf32>
    %17 = arith.mulf %14, %16 : vector<8x256xf32>
    %18 = arith.addf %11, %17 : vector<8x256xf32>
    %c0_9 = arith.constant 0 : index
    %c0_10 = arith.constant 0 : index
    %c32 = arith.constant 32 : index
    %c0_11 = arith.constant 0 : index
    %19 = vector.load %arg3[%c0_9, %c0_10, %c32, %c0_11] : memref<1x1x64x256xbf16, #tpu.memory_space<vmem>>, vector<1x1x8x256xbf16>
    %20 = vector.shape_cast %19 : vector<1x1x8x256xbf16> to vector<8x256xbf16>
    %21 = arith.extf %20 : vector<8x256xbf16> to vector<8x256xf32>
    %22 = vector.extract_strided_slice %5 {offsets = [4, 0], sizes = [1, 256], strides = [1, 1]} : vector<8x256xf32> to vector<1x256xf32>
    %23 = vector.broadcast %22 : vector<1x256xf32> to vector<8x256xf32>
    %24 = arith.mulf %21, %23 : vector<8x256xf32>
    %25 = arith.addf %18, %24 : vector<8x256xf32>
    %c0_12 = arith.constant 0 : index
    %c0_13 = arith.constant 0 : index
    %c48 = arith.constant 48 : index
    %c0_14 = arith.constant 0 : index
    %26 = vector.load %arg3[%c0_12, %c0_13, %c48, %c0_14] : memref<1x1x64x256xbf16, #tpu.memory_space<vmem>>, vector<1x1x8x256xbf16>
    %27 = vector.shape_cast %26 : vector<1x1x8x256xbf16> to vector<8x256xbf16>
    %28 = arith.extf %27 : vector<8x256xbf16> to vector<8x256xf32>
    %29 = vector.extract_strided_slice %5 {offsets = [6, 0], sizes = [1, 256], strides = [1, 1]} : vector<8x256xf32> to vector<1x256xf32>
    %30 = vector.broadcast %29 : vector<1x256xf32> to vector<8x256xf32>
    %31 = arith.mulf %28, %30 : vector<8x256xf32>
    %32 = arith.addf %25, %31 : vector<8x256xf32>
    %33 = arith.extui %0 : i1 to i32
    %c0_i32_15 = arith.constant 0 : i32
    %34 = arith.cmpi ne, %33, %c0_i32_15 : i32
    scf.if %34 {
      %c0_33 = arith.constant 0 : index
      %c0_34 = arith.constant 0 : index
      %c0_35 = arith.constant 0 : index
      %c0_36 = arith.constant 0 : index
      %70 = vector.load %arg5[%c0_33, %c0_34, %c0_35, %c0_36] : memref<1x2x8x256xf32, #tpu.memory_space<vmem>>, vector<1x1x8x256xf32>
      %71 = vector.shape_cast %70 : vector<1x1x8x256xf32> to vector<8x256xf32>
      %72 = vector.shape_cast %32 : vector<8x256xf32> to vector<1x1x8x256xf32>
      tpu.vector_store %arg5[%c0_33, %c0_34, %c0_35, %c0_36], %72 {strides = array<i32>} : memref<1x2x8x256xf32, #tpu.memory_space<vmem>>, vector<1x1x8x256xf32>,
    } else {
    }
    %c0_i32_16 = arith.constant 0 : i32
    %35 = arith.cmpi ne, %arg2, %c0_i32_16 : i32
    %36 = arith.extui %35 : i1 to i32
    %c0_i32_17 = arith.constant 0 : i32
    %37 = arith.cmpi ne, %36, %c0_i32_17 : i32
    scf.if %37 {
      %c0_33 = arith.constant 0 : index
      %c0_34 = arith.constant 0 : index
      %c0_35 = arith.constant 0 : index
      %c0_36 = arith.constant 0 : index
      %70 = vector.load %arg5[%c0_33, %c0_34, %c0_35, %c0_36] : memref<1x2x8x256xf32, #tpu.memory_space<vmem>>, vector<1x1x8x256xf32>
      %71 = vector.shape_cast %70 : vector<1x1x8x256xf32> to vector<8x256xf32>
      %72 = arith.addf %71, %32 : vector<8x256xf32>
      %c0_37 = arith.constant 0 : index
      %c0_38 = arith.constant 0 : index
      %c0_39 = arith.constant 0 : index
      %c0_40 = arith.constant 0 : index
      %73 = vector.load %arg5[%c0_37, %c0_38, %c0_39, %c0_40] : memref<1x2x8x256xf32, #tpu.memory_space<vmem>>, vector<1x1x8x256xf32>
      %74 = vector.shape_cast %73 : vector<1x1x8x256xf32> to vector<8x256xf32>
      %75 = vector.shape_cast %72 : vector<8x256xf32> to vector<1x1x8x256xf32>
      tpu.vector_store %arg5[%c0_37, %c0_38, %c0_39, %c0_40], %75 {strides = array<i32>} : memref<1x2x8x256xf32, #tpu.memory_space<vmem>>, vector<1x1x8x256xf32>,
    } else {
    }
    %c0_18 = arith.constant 0 : index
    %c0_19 = arith.constant 0 : index
    %c8 = arith.constant 8 : index
    %c0_20 = arith.constant 0 : index
    %38 = vector.load %arg3[%c0_18, %c0_19, %c8, %c0_20] : memref<1x1x64x256xbf16, #tpu.memory_space<vmem>>, vector<1x1x8x256xbf16>
    %39 = vector.shape_cast %38 : vector<1x1x8x256xbf16> to vector<8x256xbf16>
    %40 = arith.extf %39 : vector<8x256xbf16> to vector<8x256xf32>
    %41 = vector.extract_strided_slice %5 {offsets = [1, 0], sizes = [1, 256], strides = [1, 1]} : vector<8x256xf32> to vector<1x256xf32>
    %42 = vector.broadcast %41 : vector<1x256xf32> to vector<8x256xf32>
    %43 = arith.mulf %40, %42 : vector<8x256xf32>
    %c0_21 = arith.constant 0 : index
    %c0_22 = arith.constant 0 : index
    %c24 = arith.constant 24 : index
    %c0_23 = arith.constant 0 : index
    %44 = vector.load %arg3[%c0_21, %c0_22, %c24, %c0_23] : memref<1x1x64x256xbf16, #tpu.memory_space<vmem>>, vector<1x1x8x256xbf16>
    %45 = vector.shape_cast %44 : vector<1x1x8x256xbf16> to vector<8x256xbf16>
    %46 = arith.extf %45 : vector<8x256xbf16> to vector<8x256xf32>
    %47 = vector.extract_strided_slice %5 {offsets = [3, 0], sizes = [1, 256], strides = [1, 1]} : vector<8x256xf32> to vector<1x256xf32>
    %48 = vector.broadcast %47 : vector<1x256xf32> to vector<8x256xf32>
    %49 = arith.mulf %46, %48 : vector<8x256xf32>
    %50 = arith.addf %43, %49 : vector<8x256xf32>
    %c0_24 = arith.constant 0 : index
    %c0_25 = arith.constant 0 : index
    %c40 = arith.constant 40 : index
    %c0_26 = arith.constant 0 : index
    %51 = vector.load %arg3[%c0_24, %c0_25, %c40, %c0_26] : memref<1x1x64x256xbf16, #tpu.memory_space<vmem>>, vector<1x1x8x256xbf16>
    %52 = vector.shape_cast %51 : vector<1x1x8x256xbf16> to vector<8x256xbf16>
    %53 = arith.extf %52 : vector<8x256xbf16> to vector<8x256xf32>
    %54 = vector.extract_strided_slice %5 {offsets = [5, 0], sizes = [1, 256], strides = [1, 1]} : vector<8x256xf32> to vector<1x256xf32>
    %55 = vector.broadcast %54 : vector<1x256xf32> to vector<8x256xf32>
    %56 = arith.mulf %53, %55 : vector<8x256xf32>
    %57 = arith.addf %50, %56 : vector<8x256xf32>
    %c0_27 = arith.constant 0 : index
    %c0_28 = arith.constant 0 : index
    %c56 = arith.constant 56 : index
    %c0_29 = arith.constant 0 : index
    %58 = vector.load %arg3[%c0_27, %c0_28, %c56, %c0_29] : memref<1x1x64x256xbf16, #tpu.memory_space<vmem>>, vector<1x1x8x256xbf16>
    %59 = vector.shape_cast %58 : vector<1x1x8x256xbf16> to vector<8x256xbf16>
    %60 = arith.extf %59 : vector<8x256xbf16> to vector<8x256xf32>
    %61 = vector.extract_strided_slice %5 {offsets = [7, 0], sizes = [1, 256], strides = [1, 1]} : vector<8x256xf32> to vector<1x256xf32>
    %62 = vector.broadcast %61 : vector<1x256xf32> to vector<8x256xf32>
    %63 = arith.mulf %60, %62 : vector<8x256xf32>
    %64 = arith.addf %57, %63 : vector<8x256xf32>
    %65 = arith.extui %0 : i1 to i32
    %c0_i32_30 = arith.constant 0 : i32
    %66 = arith.cmpi ne, %65, %c0_i32_30 : i32
    scf.if %66 {
      %c0_33 = arith.constant 0 : index
      %c1 = arith.constant 1 : index
      %c0_34 = arith.constant 0 : index
      %c0_35 = arith.constant 0 : index
      %70 = vector.load %arg5[%c0_33, %c1, %c0_34, %c0_35] : memref<1x2x8x256xf32, #tpu.memory_space<vmem>>, vector<1x1x8x256xf32>
      %71 = vector.shape_cast %70 : vector<1x1x8x256xf32> to vector<8x256xf32>
      %72 = vector.shape_cast %64 : vector<8x256xf32> to vector<1x1x8x256xf32>
      tpu.vector_store %arg5[%c0_33, %c1, %c0_34, %c0_35], %72 {strides = array<i32>} : memref<1x2x8x256xf32, #tpu.memory_space<vmem>>, vector<1x1x8x256xf32>,
    } else {
    }
    %c0_i32_31 = arith.constant 0 : i32
    %67 = arith.cmpi ne, %arg2, %c0_i32_31 : i32
    %68 = arith.extui %67 : i1 to i32
    %c0_i32_32 = arith.constant 0 : i32
    %69 = arith.cmpi ne, %68, %c0_i32_32 : i32
    scf.if %69 {
      %c0_33 = arith.constant 0 : index
      %c1 = arith.constant 1 : index
      %c0_34 = arith.constant 0 : index
      %c0_35 = arith.constant 0 : index
      %70 = vector.load %arg5[%c0_33, %c1, %c0_34, %c0_35] : memref<1x2x8x256xf32, #tpu.memory_space<vmem>>, vector<1x1x8x256xf32>
      %71 = vector.shape_cast %70 : vector<1x1x8x256xf32> to vector<8x256xf32>
      %72 = arith.addf %71, %64 : vector<8x256xf32>
      %c0_36 = arith.constant 0 : index
      %c1_37 = arith.constant 1 : index
      %c0_38 = arith.constant 0 : index
      %c0_39 = arith.constant 0 : index
      %73 = vector.load %arg5[%c0_36, %c1_37, %c0_38, %c0_39] : memref<1x2x8x256xf32, #tpu.memory_space<vmem>>, vector<1x1x8x256xf32>
      %74 = vector.shape_cast %73 : vector<1x1x8x256xf32> to vector<8x256xf32>
      %75 = vector.shape_cast %72 : vector<8x256xf32> to vector<1x1x8x256xf32>
      tpu.vector_store %arg5[%c0_36, %c1_37, %c0_38, %c0_39], %75 {strides = array<i32>} : memref<1x2x8x256xf32, #tpu.memory_space<vmem>>, vector<1x1x8x256xf32>,
    } else {
    }
    return
  }
  func.func @transform_0(%arg0: i32, %arg1: i32, %arg2: i32) -> (i32, i32, i32, i32) {
    %c0_i32 = arith.constant 0 : i32
    %c0_i32_0 = arith.constant 0 : i32
    return %arg2, %arg1, %c0_i32, %arg0 : i32, i32, i32, i32
  }
  func.func @transform_1(%arg0: i32, %arg1: i32, %arg2: i32) -> (i32, i32, i32) {
    %c0_i32 = arith.constant 0 : i32
    %c0_i32_0 = arith.constant 0 : i32
    return %arg1, %c0_i32, %arg0 : i32, i32, i32
  }
  func.func @transform_2(%arg0: i32, %arg1: i32, %arg2: i32) -> (i32, i32, i32, i32) {
    %c0_i32 = arith.constant 0 : i32
    %c0_i32_0 = arith.constant 0 : i32
    %c0_i32_1 = arith.constant 0 : i32
    return %arg1, %c0_i32, %c0_i32_0, %arg0 : i32, i32, i32, i32
  }
}

</mosaic_0001>

<llo_original>
// kernel: tpu_custom_call.1
$region0: #{tpu_custom_call.1}
  #allocation0 [shape = 'u32[]', space=smem, size = 0x4, offset = 0x4, fixed_abs, tag = 'smem constant byte address 0x4 - core index']
  #allocation1 [shape = 'u32[144,128]{1,0:T(1,128)}', space=vmem, size = 0x12000, scoped, tag = 'internal scratch']
  %s0 = inlined_call_operand.hbm [shape: bf16[2,2,64,256], index: 0, kind: input, shape index: {}]
  %s1 = inlined_call_operand.hbm [shape: bf16[2,8,256], index: 1, kind: input, shape index: {}]
  %s2 = inlined_call_operand.hbm [shape: f32[2,2,8,256], index: 2, kind: output, shape index: {}]
  %s3 = sld [smem:[#allocation0]]
  $region65: #{tpu_custom_call.1} parent=0
    _
  %s5 = ssub.s32 1, %s3
  %s6 = scalar_select 0, %s5, %s3
  $region1: #{tpu_custom_call.1} parent=0
    #allocation2 [shape = 'u8[65536]{0}', space=vmem, size = 0x10000, scoped, tag = 'input window, operand 0']
    #allocation3 [shape = 's32[2]{0}', space=sflag, size = 0x8, scoped, tag = 'scoped memory for tpu_custom_call.1']
    #allocation4 [shape = 's32[2]{0}', space=sflag, size = 0x8, scoped, tag = 'scoped memory for tpu_custom_call.1']
    #allocation5 [shape = 'u8[8192]{0}', space=vmem, size = 0x2000, scoped, tag = 'input window, operand 1']
    #allocation6 [shape = 's32[2]{0}', space=sflag, size = 0x8, scoped, tag = 'scoped memory for tpu_custom_call.1']
    #allocation7 [shape = 'u8[32768]{0}', space=vmem, size = 0x8000, scoped, tag = 'output window, operand 0']
    %7 = vsyncpa [#allocation3], 0
    %s8 = scalar_lea.sflag [#allocation3], 1
    %9 = vsyncpa %s8, 0
    %10 = vsyncpa [#allocation6], 0
    %s11 = scalar_lea.sflag [#allocation6], 1
    %12 = vsyncpa %s11, 0
    %13 = vsyncpa [#allocation4], 0
    %s14 = scalar_lea.sflag [#allocation4], 1
    %15 = vsyncpa %s14, 0
    loop: start=0, step=1, limit=6
    $region2: #{tpu_custom_call.1} parent=1 // loop_pre_header
      _
    $region3: #{tpu_custom_call.1} parent=1 // loop_header
      %s17 = sphi 0, %s21
      %p18 = scmp.ge.s32.totalorder %s17, 6
      %s24 = sphi 0, %s43
      %s25 = sphi 0, %s39
      %s26 = sphi 0, %s35
      %s27 = sphi 0, %s24
      %s28 = sphi 0, %s25
      %s29 = sphi 0, %s26
      %s30 = sphi 0, %s27
      %s31 = sphi 0, %s28
      %s32 = sphi 0, %s29
      %s50 = sphi 0, %s52
      %s53 = sphi 0, %s50
      %s54 = sphi 0, %s53
      %s70 = sphi 0, %s54
      %s78 = sphi 0, %s80
      %s81 = sphi 0, %s78
      %s82 = sphi 0, %s81
      %s98 = sphi 0, %s82
      %s106 = sphi 0, %s108
      %s109 = sphi 0, %s106
      %s110 = sphi 0, %s109
      %s126 = sphi 0, %s110
    $region4: #{tpu_custom_call.1} parent=1 // loop_header_branch
      %20 = sbr.rel (%p18) target = $region8
    $region5: #{tpu_custom_call.1} parent=1 // loop_body
      %s22 = ssub.s32 %s17, 1
      %s23 = ssub.s32 %s17, 2
      %s33 = sadd.s32 1, %s26
      %p34 = scmp.ge.s32.totalorder %s33, 2
      %s35 = scalar_select %p34, 0, %s33
      %s36 = sadd.s32 1, %s25
      %s37 = scalar_select %p34, %s36, %s25
      %p38 = scmp.ge.s32.totalorder %s37, 2
      %s39 = scalar_select %p38, 0, %s37
      %s40 = sadd.s32 1, %s24
      %s41 = scalar_select %p38, %s40, %s24
      %p42 = scmp.ge.s32.totalorder %s41, 1
      %s43 = scalar_select %p42, 0, %s41
      %s44 = ssub.s32 %s26, %s35
      %s45 = ssub.s32 %s25, %s39
      %s46 = sor.u32 %s44, %s45
      %s47 = ssub.s32 %s24, %s43
      %s48 = sor.u32 %s46, %s47
      %p49 = scmp.eq.s32.totalorder %s48, 0
      %s51 = sadd.s32 %s50, 1
      %s52 = scalar_select %p49, %s50, %s51
      %p55 = pneg %p49
      %p56 = scmp.eq.s32.totalorder %s17, 3
      %p57 = por %p55, %p56
      %p58 = scmp.ne.s32.totalorder %s50, %s53
      %p59 = scmp.eq.s32.totalorder %s17, 0
      %p60 = por %p58, %p59
      %p61 = scmp.ne.s32.totalorder %s50, %s53
      %p62 = scmp.eq.s32.totalorder %s22, 3
      %p63 = por %p61, %p62
      %p64 = scmp.ne.s32.totalorder %s53, %s54
      %p65 = scmp.eq.s32.totalorder %s22, 0
      %p66 = por %p64, %p65
      %p67 = scmp.ne.s32.totalorder %s53, %s54
      %p68 = scmp.eq.s32.totalorder %s23, 3
      %p69 = por %p67, %p68
      %p71 = scmp.ne.s32.totalorder %s54, %s70
      %p72 = scmp.eq.s32.totalorder %s23, 0
      %p73 = por %p71, %p72
      %s74 = ssub.s32 %s25, %s39
      %s75 = ssub.s32 %s24, %s43
      %s76 = sor.u32 %s74, %s75
      %p77 = scmp.eq.s32.totalorder %s76, 0
      %s79 = sadd.s32 %s78, 1
      %s80 = scalar_select %p77, %s78, %s79
      %p83 = pneg %p77
      %p84 = scmp.eq.s32.totalorder %s17, 3
      %p85 = por %p83, %p84
      %p86 = scmp.ne.s32.totalorder %s78, %s81
      %p87 = scmp.eq.s32.totalorder %s17, 0
      %p88 = por %p86, %p87
      %p89 = scmp.ne.s32.totalorder %s78, %s81
      %p90 = scmp.eq.s32.totalorder %s22, 3
      %p91 = por %p89, %p90
      %p92 = scmp.ne.s32.totalorder %s81, %s82
      %p93 = scmp.eq.s32.totalorder %s22, 0
      %p94 = por %p92, %p93
      %p95 = scmp.ne.s32.totalorder %s81, %s82
      %p96 = scmp.eq.s32.totalorder %s23, 3
      %p97 = por %p95, %p96
      %p99 = scmp.ne.s32.totalorder %s82, %s98
      %p100 = scmp.eq.s32.totalorder %s23, 0
      %p101 = por %p99, %p100
      %s102 = ssub.s32 %s25, %s39
      %s103 = ssub.s32 %s24, %s43
      %s104 = sor.u32 %s102, %s103
      %p105 = scmp.eq.s32.totalorder %s104, 0
      %s107 = sadd.s32 %s106, 1
      %s108 = scalar_select %p105, %s106, %s107
      %p111 = pneg %p105
      %p112 = scmp.eq.s32.totalorder %s17, 3
      %p113 = por %p111, %p112
      %p114 = scmp.ne.s32.totalorder %s106, %s109
      %p115 = scmp.eq.s32.totalorder %s17, 0
      %p116 = por %p114, %p115
      %p117 = scmp.ne.s32.totalorder %s106, %s109
      %p118 = scmp.eq.s32.totalorder %s22, 3
      %p119 = por %p117, %p118
      %p120 = scmp.ne.s32.totalorder %s109, %s110
      %p121 = scmp.eq.s32.totalorder %s22, 0
      %p122 = por %p120, %p121
      %p123 = scmp.ne.s32.totalorder %s109, %s110
      %p124 = scmp.eq.s32.totalorder %s23, 3
      %p125 = por %p123, %p124
      %p127 = scmp.ne.s32.totalorder %s110, %s126
      %p128 = scmp.eq.s32.totalorder %s23, 0
      %p129 = por %p127, %p128
      %p130 = scmp.le.s32.totalorder 1, %s17
      %p131 = scmp.lt.s32.totalorder %s17, 5
      %p132 = pnand %p130, %p131
      %p133 = pneg %p132
      // Predicated region
      $region9: #{tpu_custom_call.1} parent=5 // pred_check
        _
      $region10: #{tpu_custom_call.1} parent=5 // pred_check_branch
        %135 = sbr.rel (%p132) target = $region12
      $region11: #{tpu_custom_call.1} parent=5 // pred_region
        %s136 = ssub.s32 %s17, 1
      $region12: #{tpu_custom_call.1} parent=5 // pred_fallthru
        _
      %p137 = scmp.lt.s32.totalorder %s17, 4
      // Predicated region
      $region13: #{tpu_custom_call.1} parent=5 // pred_check
        %p138 = pneg %p137
      $region14: #{tpu_custom_call.1} parent=5 // pred_check_branch
        %140 = sbr.rel (%p138) target = $region16
      $region15: #{tpu_custom_call.1} parent=5 // pred_region
        // Predicated region
        $region17: #{tpu_custom_call.1} parent=15 // pred_check
          %p141 = pneg %p60
        $region18: #{tpu_custom_call.1} parent=15 // pred_check_branch
          %143 = sbr.rel (%p141) target = $region20
        $region19: #{tpu_custom_call.1} parent=15 // pred_region
          %s144 = sand.u32 %s50, 1
          %s145 = scalar_lea.sflag [#allocation3], %s144
          %s146 = sand.u32 %s50, 1
          %s147 = smul.addr %s146, 64
          %s148 = scalar_lea.vmem [#allocation2], %s147
          %s149 = smul.u32 2, %s24
          %s151 = ssub.s32 1024, 1024
          %152 = vsyncadd %s145, %s151
          %s153 = smul.addr %s25, 16
          %s154 = sadd.s32 %s149, %s153
          %s155 = smul.addr %s26, 32
          %s156 = sadd.s32 %s154, %s155
          %s157 = smul.addr %s156, 64
          %s158 = scalar_lea.hbm %s0, %s157
          %s159 = sshll.u32 %s148, 4
          %s160 = int_to_ptr.vmem [resolvable:$true] %s159
          %165 = dma.hbm_to_vmem [thread:$0]  %s158, 1024, %s160, %s145, 128, 128, 8
        $region20: #{tpu_custom_call.1} parent=15 // pred_fallthru
          _
        // Predicated region
        $region21: #{tpu_custom_call.1} parent=15 // pred_check
          %p166 = pneg %p88
        $region22: #{tpu_custom_call.1} parent=15 // pred_check_branch
          %168 = sbr.rel (%p166) target = $region24
        $region23: #{tpu_custom_call.1} parent=15 // pred_region
          %s169 = sand.u32 %s78, 1
          %s170 = scalar_lea.sflag [#allocation6], %s169
          %s171 = sand.u32 %s78, 1
          %s172 = smul.addr %s171, 8
          %s173 = scalar_lea.vmem [#allocation5], %s172
          %s174 = smul.u32 2, %s24
          %s176 = ssub.s32 128, 128
          %177 = vsyncadd %s170, %s176
          %s178 = smul.addr %s25, 2
          %s179 = sadd.s32 %s174, %s178
          %s180 = smul.addr %s179, 64
          %s181 = scalar_lea.hbm %s1, %s180
          %s183 = sshll.u32 %s173, 4
          %s184 = int_to_ptr.vmem [resolvable:$true] %s183
          %186 = dma.hbm_to_vmem [thread:$0]  %s181, 128, %s184, %s170
        $region24: #{tpu_custom_call.1} parent=15 // pred_fallthru
          _
      $region16: #{tpu_custom_call.1} parent=5 // pred_fallthru
        _
      %p187 = scmp.le.s32.totalorder 1, %s17
      %p188 = scmp.lt.s32.totalorder %s17, 5
      %p189 = pnand %p187, %p188
      %p190 = pneg %p189
      // Predicated region
      $region25: #{tpu_custom_call.1} parent=5 // pred_check
        _
      $region26: #{tpu_custom_call.1} parent=5 // pred_check_branch
        %192 = sbr.rel (%p189) target = $region28
      $region27: #{tpu_custom_call.1} parent=5 // pred_region
        %s193 = ssub.s32 %s17, 1
        %s194 = sand.u32 %s53, 1
        %s195 = scalar_lea.sflag [#allocation3], %s194
        %s196 = sand.u32 %s53, 1
        %s197 = smul.addr %s196, 64
        %s198 = scalar_lea.vmem [#allocation2], %s197
        // Predicated region
        $region29: #{tpu_custom_call.1} parent=27 // pred_check
          %p199 = pneg %p66
        $region30: #{tpu_custom_call.1} parent=27 // pred_check_branch
          %201 = sbr.rel (%p199) target = $region32
        $region31: #{tpu_custom_call.1} parent=27 // pred_region
          %202 = dma.done %s195, 1024
        $region32: #{tpu_custom_call.1} parent=27 // pred_fallthru
          _
        %s203 = sand.u32 %s81, 1
        %s204 = scalar_lea.sflag [#allocation6], %s203
        %s205 = sand.u32 %s81, 1
        %s206 = smul.addr %s205, 8
        %s207 = scalar_lea.vmem [#allocation5], %s206
        // Predicated region
        $region33: #{tpu_custom_call.1} parent=27 // pred_check
          %p208 = pneg %p94
        $region34: #{tpu_custom_call.1} parent=27 // pred_check_branch
          %210 = sbr.rel (%p208) target = $region36
        $region35: #{tpu_custom_call.1} parent=27 // pred_region
          %211 = dma.done %s204, 128
        $region36: #{tpu_custom_call.1} parent=27 // pred_fallthru
          _
        %s212 = sand.u32 %s53, 1
        %s213 = scalar_lea.sflag [#allocation3], %s212
        %s214 = sand.u32 %s53, 1
        %s215 = smul.addr %s214, 64
        %s216 = scalar_lea.vmem [#allocation2], %s215
        %p217 = pneg %p66
        %p218 = pneg %p63
        %s219 = sand.u32 %s81, 1
        %s220 = scalar_lea.sflag [#allocation6], %s219
        %s221 = sand.u32 %s81, 1
        %s222 = smul.addr %s221, 8
        %s223 = scalar_lea.vmem [#allocation5], %s222
        %p224 = pneg %p94
        %p225 = pneg %p91
        %p226 = pneg %p122
        %p227 = pneg %p119
        %s228 = sand.u32 %s109, 1
        %s229 = scalar_lea.sflag [#allocation4], %s228
        %s230 = sand.u32 %s109, 1
        %s231 = smul.addr %s230, 32
        %s232 = scalar_lea.vmem [#allocation7], %s231
        %s233 = smul.u32 2, %s27
        %s234 = smul.u32 2, %s27
        %s235 = smul.u32 2, %s27
        %p236 = scmp.eq.s32.totalorder %s29, 0
        %v237 = vld [vmem:[%s207] sm:$0xff]
        %v238 = vunpack.c.l.bf16 %v237
        %v239 = vunpack.c.h.bf16 %v237
        %v240 = vmul.f32 %v238, 0.25
        %v241 = vmul.f32 %v239, 0.25
        %v242 = vld [vmem:[%s198] sm:$0xff]
        %v243 = vunpack.c.l.bf16 %v242
        %v244 = vunpack.c.h.bf16 %v242
        %v245 = vlaneseq
        %v246 = vshrl.u32 %v245, 7
        %v247 = vsub.s32 0, %v246
        %v248 = vrot.slane %v240, %v247
        %v249 = vlaneseq
        %v250 = vshrl.u32 %v249, 7
        %v251 = vsub.s32 0, %v250
        %v252 = vrot.slane %v241, %v251
        %v253 = vmul.f32 %v243, %v248
        %v254 = vmul.f32 %v244, %v252
        %v255 = vld [vmem:[%s198 + $0x10] sm:$0xff]
        %v256 = vunpack.c.l.bf16 %v255
        %v257 = vunpack.c.h.bf16 %v255
        %v258 = vlaneseq
        %v259 = vshrl.u32 %v258, 7
        %v260 = vsub.s32 2, %v259
        %v261 = vrot.slane %v240, %v260
        %v262 = vlaneseq
        %v263 = vshrl.u32 %v262, 7
        %v264 = vsub.s32 2, %v263
        %v265 = vrot.slane %v241, %v264
        %v266 = vmul.f32 %v256, %v261
        %v267 = vmul.f32 %v257, %v265
        %v268 = vadd.f32 %v253, %v266
        %v269 = vadd.f32 %v254, %v267
        %v270 = vld [vmem:[%s198 + $0x20] sm:$0xff]
        %v271 = vunpack.c.l.bf16 %v270
        %v272 = vunpack.c.h.bf16 %v270
        %v273 = vlaneseq
        %v274 = vshrl.u32 %v273, 7
        %v275 = vsub.s32 4, %v274
        %v276 = vrot.slane %v240, %v275
        %v277 = vlaneseq
        %v278 = vshrl.u32 %v277, 7
        %v279 = vsub.s32 4, %v278
        %v280 = vrot.slane %v241, %v279
        %v281 = vmul.f32 %v271, %v276
        %v282 = vmul.f32 %v272, %v280
        %v283 = vadd.f32 %v268, %v281
        %v284 = vadd.f32 %v269, %v282
        %v285 = vld [vmem:[%s198 + $0x30] sm:$0xff]
        %v286 = vunpack.c.l.bf16 %v285
        %v287 = vunpack.c.h.bf16 %v285
        %v288 = vlaneseq
        %v289 = vshrl.u32 %v288, 7
        %v290 = vsub.s32 6, %v289
        %v291 = vrot.slane %v240, %v290
        %v292 = vlaneseq
        %v293 = vshrl.u32 %v292, 7
        %v294 = vsub.s32 6, %v293
        %v295 = vrot.slane %v241, %v294
        %v296 = vmul.f32 %v286, %v291
        %v297 = vmul.f32 %v287, %v295
        %v298 = vadd.f32 %v283, %v296
        %v299 = vadd.f32 %v284, %v297
        // Predicated region
        $region37: #{tpu_custom_call.1} parent=27 // pred_check
          %p300 = pneg %p236
        $region38: #{tpu_custom_call.1} parent=27 // pred_check_branch
          %302 = sbr.rel (%p300) target = $region40
        $region39: #{tpu_custom_call.1} parent=27 // pred_region
          %303 = vst [vmem:[%s232] sm:$0xff] %v298
          %304 = vst [vmem:[%s232 + $0x8] sm:$0xff] %v299
        $region40: #{tpu_custom_call.1} parent=27 // pred_fallthru
          _
        %p305 = scmp.ne.s32.totalorder %s29, 0
        // Predicated region
        $region41: #{tpu_custom_call.1} parent=27 // pred_check
          %p306 = pneg %p305
        $region42: #{tpu_custom_call.1} parent=27 // pred_check_branch
          %308 = sbr.rel (%p306) target = $region44
        $region43: #{tpu_custom_call.1} parent=27 // pred_region
          %v309 = vld [vmem:[%s232] sm:$0xff]
          %v310 = vld [vmem:[%s232 + $0x8] sm:$0xff]
          %v311 = vadd.f32 %v309, %v298
          %v312 = vadd.f32 %v310, %v299
          %313 = vst [vmem:[%s232] sm:$0xff] %v311
          %314 = vst [vmem:[%s232 + $0x8] sm:$0xff] %v312
        $region44: #{tpu_custom_call.1} parent=27 // pred_fallthru
          _
        %v315 = vld [vmem:[%s198 + $0x8] sm:$0xff]
        %v316 = vunpack.c.l.bf16 %v315
        %v317 = vunpack.c.h.bf16 %v315
        %v318 = vlaneseq
        %v319 = vshrl.u32 %v318, 7
        %v320 = vsub.s32 1, %v319
        %v321 = vrot.slane %v240, %v320
        %v322 = vlaneseq
        %v323 = vshrl.u32 %v322, 7
        %v324 = vsub.s32 1, %v323
        %v325 = vrot.slane %v241, %v324
        %v326 = vmul.f32 %v316, %v321
        %v327 = vmul.f32 %v317, %v325
        %v328 = vld [vmem:[%s198 + $0x18] sm:$0xff]
        %v329 = vunpack.c.l.bf16 %v328
        %v330 = vunpack.c.h.bf16 %v328
        %v331 = vlaneseq
        %v332 = vshrl.u32 %v331, 7
        %v333 = vsub.s32 3, %v332
        %v334 = vrot.slane %v240, %v333
        %v335 = vlaneseq
        %v336 = vshrl.u32 %v335, 7
        %v337 = vsub.s32 3, %v336
        %v338 = vrot.slane %v241, %v337
        %v339 = vmul.f32 %v329, %v334
        %v340 = vmul.f32 %v330, %v338
        %v341 = vadd.f32 %v326, %v339
        %v342 = vadd.f32 %v327, %v340
        %v343 = vld [vmem:[%s198 + $0x28] sm:$0xff]
        %v344 = vunpack.c.l.bf16 %v343
        %v345 = vunpack.c.h.bf16 %v343
        %v346 = vlaneseq
        %v347 = vshrl.u32 %v346, 7
        %v348 = vsub.s32 5, %v347
        %v349 = vrot.slane %v240, %v348
        %v350 = vlaneseq
        %v351 = vshrl.u32 %v350, 7
        %v352 = vsub.s32 5, %v351
        %v353 = vrot.slane %v241, %v352
        %v354 = vmul.f32 %v344, %v349
        %v355 = vmul.f32 %v345, %v353
        %v356 = vadd.f32 %v341, %v354
        %v357 = vadd.f32 %v342, %v355
        %v358 = vld [vmem:[%s198 + $0x38] sm:$0xff]
        %v359 = vunpack.c.l.bf16 %v358
        %v360 = vunpack.c.h.bf16 %v358
        %v361 = vlaneseq
        %v362 = vshrl.u32 %v361, 7
        %v363 = vsub.s32 7, %v362
        %v364 = vrot.slane %v240, %v363
        %v365 = vlaneseq
        %v366 = vshrl.u32 %v365, 7
        %v367 = vsub.s32 7, %v366
        %v368 = vrot.slane %v241, %v367
        %v369 = vmul.f32 %v359, %v364
        %v370 = vmul.f32 %v360, %v368
        %v371 = vadd.f32 %v356, %v369
        %v372 = vadd.f32 %v357, %v370
        // Predicated region
        $region45: #{tpu_custom_call.1} parent=27 // pred_check
          %p373 = pneg %p236
        $region46: #{tpu_custom_call.1} parent=27 // pred_check_branch
          %375 = sbr.rel (%p373) target = $region48
        $region47: #{tpu_custom_call.1} parent=27 // pred_region
          %s376 = scalar_lea.vmem %s232, 16 [#allocation7]
          %377 = vst [vmem:[%s376] sm:$0xff] %v371
          %378 = vst [vmem:[%s376 + $0x8] sm:$0xff] %v372
        $region48: #{tpu_custom_call.1} parent=27 // pred_fallthru
          _
        // Predicated region
        $region49: #{tpu_custom_call.1} parent=27 // pred_check
          %p379 = pneg %p305
        $region50: #{tpu_custom_call.1} parent=27 // pred_check_branch
          %381 = sbr.rel (%p379) target = $region52
        $region51: #{tpu_custom_call.1} parent=27 // pred_region
          %s382 = scalar_lea.vmem %s232, 16 [#allocation7]
          %v383 = vld [vmem:[%s382] sm:$0xff]
          %v384 = vld [vmem:[%s382 + $0x8] sm:$0xff]
          %v385 = vadd.f32 %v383, %v371
          %v386 = vadd.f32 %v384, %v372
          %387 = vst [vmem:[%s382] sm:$0xff] %v385
          %388 = vst [vmem:[%s382 + $0x8] sm:$0xff] %v386
        $region52: #{tpu_custom_call.1} parent=27 // pred_fallthru
          _
        %s389 = sand.u32 %s109, 1
        %s390 = scalar_lea.sflag [#allocation4], %s389
        %s391 = sand.u32 %s109, 1
        %s392 = smul.addr %s391, 32
        %s393 = scalar_lea.vmem [#allocation7], %s392
        // Predicated region
        $region53: #{tpu_custom_call.1} parent=27 // pred_check
          %p394 = pneg %p119
        $region54: #{tpu_custom_call.1} parent=27 // pred_check_branch
          %396 = sbr.rel (%p394) target = $region56
        $region55: #{tpu_custom_call.1} parent=27 // pred_region
          %s397 = smul.u32 2, %s27
          %s399 = ssub.s32 512, 512
          %400 = vsyncadd %s390, %s399
          %s401 = smul.addr %s28, 4
          %s402 = sadd.s32 %s397, %s401
          %s403 = smul.addr %s402, 128
          %s404 = scalar_lea.hbm %s2, %s403
          %s405 = sshll.u32 %s393, 4
          %s406 = int_to_ptr.vmem [resolvable:$true] %s405
          %411 = dma.vmem_to_hbm [thread:$0]  %s406, 512, %s404, %s390, 256, 256, 16
        $region56: #{tpu_custom_call.1} parent=27 // pred_fallthru
          _
      $region28: #{tpu_custom_call.1} parent=5 // pred_fallthru
        _
      %p412 = scmp.le.s32.totalorder 2, %s17
      // Predicated region
      $region57: #{tpu_custom_call.1} parent=5 // pred_check
        %p413 = pneg %p412
      $region58: #{tpu_custom_call.1} parent=5 // pred_check_branch
        %415 = sbr.rel (%p413) target = $region60
      $region59: #{tpu_custom_call.1} parent=5 // pred_region
        %s416 = ssub.s32 %s17, 2
        // Predicated region
        $region61: #{tpu_custom_call.1} parent=59 // pred_check
          %p417 = pneg %p125
        $region62: #{tpu_custom_call.1} parent=59 // pred_check_branch
          %419 = sbr.rel (%p417) target = $region64
        $region63: #{tpu_custom_call.1} parent=59 // pred_region
          %s420 = sand.u32 %s110, 1
          %s421 = scalar_lea.sflag [#allocation4], %s420
          %s422 = sand.u32 %s110, 1
          %s423 = smul.addr %s422, 32
          %s424 = scalar_lea.vmem [#allocation7], %s423
          %425 = dma.done %s421, 512
        $region64: #{tpu_custom_call.1} parent=59 // pred_fallthru
          _
      $region60: #{tpu_custom_call.1} parent=5 // pred_fallthru
        _
    $region6: #{tpu_custom_call.1} parent=1 // loop_footer
      %s21 = sadd.s32 1, %s17
    $region7: #{tpu_custom_call.1} parent=1 // loop_footer_branch
      %16 = sbr.rel target = $region3
    $region8: #{tpu_custom_call.1} parent=1 // loop_exit
      _
    %426 = vsyncpa [#allocation3], 1
    %s427 = scalar_lea.sflag [#allocation3], 1
    %428 = vsyncpa %s427, 1
    %429 = vsyncpa [#allocation6], 1
    %s430 = scalar_lea.sflag [#allocation6], 1
    %431 = vsyncpa %s430, 1
    %432 = vsyncpa [#allocation4], 1
    %s433 = scalar_lea.sflag [#allocation4], 1
    %434 = vsyncpa %s433, 1

</llo_original>
